<compile_context>
chip_gen: v6e
topology: v6e:2x2x1
jax: 0.10.0
libtpu: 0.0.40
codegen_flags: <defaults>
</compile_context>

<pallas_src>
import functools

import jax
import jax.numpy as jnp
from jax.experimental import pallas as pl
from jax.experimental.pallas import tpu as pltpu


def _round_up(x, m):
    return ((x + m - 1) // m) * m


def _bce_dice_boundary_kernel(logits_ref, targets_ref, out_ref, *, w, gx_scale, gy_scale):
    """One grid step: a (TB, L=H*W) slab of flattened images -> one (1,128) partial-sum row."""
    x = logits_ref[...].astype(jnp.float32)    # (TB, L)
    t = targets_ref[...].astype(jnp.float32)   # (TB, L)
    tb, L = x.shape

    # One shared transcendental: e = exp(-|x|) feeds both the stable BCE and the sigmoid.
    e = jnp.exp(-jnp.abs(x))
    p = jnp.where(x >= 0.0, 1.0, e) / (1.0 + e)                 # sigmoid(x)
    bce = jnp.maximum(x, 0.0) - x * t + jnp.log1p(e)            # stable BCE-with-logits
    sum_bce = jnp.sum(bce)                                      # retire bce early (VMEM)

    sum_pt = jnp.sum(p * t)
    sum_ppt = jnp.sum(p + t)                                    # dice denominator only needs p+t

    # Seam masks with the mean normalizers folded in, built in-kernel (no mask input/DMA).
    col = jax.lax.broadcasted_iota(jnp.int32, (1, L), 1)
    if (w & (w - 1)) == 0:
        col_in_row = jnp.bitwise_and(col, w - 1)
    else:
        col_in_row = col % w
    mask_x = jnp.where(col_in_row != (w - 1), gx_scale, 0.0)    # drop last column of each row
    mask_y = jnp.where(col < (L - w), gy_scale, 0.0)            # drop last image row

    # Boundary (image-gradient) terms via full-tile rotations (XLU).
    #   roll(p, L-1)[:, j] == p[:, (j+1) % L]  -> horizontal neighbour (next column)
    #   roll(p, L-w)[:, j] == p[:, (j+w) % L]  -> vertical neighbour (next image row)
    p_nx = pltpu.roll(p, L - 1, 1)
    t_nx = pltpu.roll(t, L - 1, 1)
    p_ny = pltpu.roll(p, L - w, 1)
    t_ny = pltpu.roll(t, L - w, 1)
    g = (jnp.abs(jnp.abs(p - p_nx) - jnp.abs(t - t_nx)) * mask_x
         + jnp.abs(jnp.abs(p - p_ny) - jnp.abs(t - t_ny)) * mask_y)
    sum_g = jnp.sum(g)                                          # already normalized per-term

    # Lane-aligned (1,128) partial-sum row (4 used lanes, rest zero).
    lane = jax.lax.broadcasted_iota(jnp.int32, (1, out_ref.shape[1]), 1)
    row = jnp.where(lane == 0, sum_bce, 0.0)
    row = jnp.where(lane == 1, sum_pt, row)
    row = jnp.where(lane == 2, sum_ppt, row)
    row = jnp.where(lane == 3, sum_g, row)
    out_ref[...] = row


def bce_dice_boundary_loss(logits, targets,
                           bce_weight=1.0, dice_weight=1.0, boundary_weight=1.0,
                           smooth=1e-5):
    assert logits.shape == targets.shape
    N, C, H, W = logits.shape
    assert H >= 2 and W >= 2, "boundary loss requires H >= 2 and W >= 2"
    nc = N * C
    L = H * W

    logits_f = logits.reshape(nc, L).astype(jnp.float32)
    targets_f = targets.reshape(nc, L).astype(jnp.float32)

    # Block sizing: ~1 MiB per input block of shape (TB, L) -> with 2 inputs x 2 pipeline
    # buffers plus ~10 full-tile temporaries this stays well inside the scoped-VMEM budget
    # on v5e/v6e and on v7x's smaller (64 MiB physical) VMEM.
    bytes_per_row = L * 4
    tb_cap = max(8, (((1 << 20) // bytes_per_row) // 8) * 8)
    TB = min(tb_cap, _round_up(nc, 8))
    # Prefer >= 2 grid steps so the parallel grid axis can feed both v7x TensorCores.
    while ((nc + TB - 1) // TB) < 2 and TB > 8:
        TB = _round_up(TB // 2, 8)
    G = (nc + TB - 1) // TB
    padded = G * TB
    if padded != nc:
        # Pad with a large finite negative logit (NOT -inf) and zero targets: padded rows
        # then contribute exactly 0 to all four sums, so the kernel needs no tail masking.
        logits_f = jnp.pad(logits_f, ((0, padded - nc), (0, 0)), constant_values=-1e4)
        targets_f = jnp.pad(targets_f, ((0, padded - nc), (0, 0)))

    kernel = functools.partial(
        _bce_dice_boundary_kernel,
        w=W,
        gx_scale=1.0 / float(nc * H * (W - 1)),
        gy_scale=1.0 / float(nc * (H - 1) * W),
    )

    partials = pl.pallas_call(
        kernel,
        out_shape=jax.ShapeDtypeStruct((G, 128), jnp.float32),
        grid_spec=pltpu.PrefetchScalarGridSpec(
            num_scalar_prefetch=0,
            grid=(G,),
            in_specs=[
                pl.BlockSpec((TB, L), lambda i: (i, 0)),     # logits slab
                pl.BlockSpec((TB, L), lambda i: (i, 0)),     # targets slab
            ],
            out_specs=pl.BlockSpec((1, 128), lambda i: (i, 0)),
        ),
        compiler_params=pltpu.CompilerParams(
            dimension_semantics=("parallel",),
            vmem_limit_bytes=32 * 1024 * 1024,
        ),
    )(logits_f, targets_f)

    # Tiny final combine + weighting in plain JAX.
    sums = jnp.sum(partials, axis=0)                # (128,)
    total_cnt = float(nc * H * W)
    bce = sums[0] / total_cnt
    dice = 1.0 - (2.0 * sums[1] + smooth) / (sums[2] + smooth)
    boundary = sums[3]                              # normalizers already folded in
    total = bce_weight * bce + dice_weight * dice + boundary_weight * boundary
    return total.astype(jnp.float32)


def _reference_loss(logits, targets, bce_weight=1.0, dice_weight=1.0,
                    boundary_weight=1.0, smooth=1e-5):
    x = logits.astype(jnp.float32)
    t = targets.astype(jnp.float32)
    p = jax.nn.sigmoid(x)
    bce = jnp.mean(jnp.maximum(x, 0.0) - x * t + jnp.log1p(jnp.exp(-jnp.abs(x))))
    dice = 1.0 - (2.0 * jnp.sum(p * t) + smooth) / (jnp.sum(p) + jnp.sum(t) + smooth)
    pgx = jnp.abs(p[:, :, :, :-1] - p[:, :, :, 1:])
    tgx = jnp.abs(t[:, :, :, :-1] - t[:, :, :, 1:])
    pgy = jnp.abs(p[:, :, :-1, :] - p[:, :, 1:, :])
    tgy = jnp.abs(t[:, :, :-1, :] - t[:, :, 1:, :])
    boundary = jnp.mean(jnp.abs(pgx - tgx)) + jnp.mean(jnp.abs(pgy - tgy))
    return bce_weight * bce + dice_weight * dice + boundary_weight * boundary


if __name__ == "__main__":
    key = jax.random.PRNGKey(0)
    k1, k2 = jax.random.split(key)
    N, C, H, W = 2, 4, 16, 16
    logits = jax.random.normal(k1, (N, C, H, W), dtype=jnp.float32)
    targets = (jax.random.uniform(k2, (N, C, H, W)) > 0.5).astype(jnp.float32)

    loss = bce_dice_boundary_loss(logits, targets)
    loss = jax.block_until_ready(loss)

    ref = _reference_loss(logits, targets)
    assert jnp.allclose(loss, ref, rtol=1e-5, atol=1e-5), (loss, ref)
    print("KERNEL_OK")
</pallas_src>

<mosaic_0001>
module attributes {stable_mosaic.version = 11 : i64} {
  func.func @_bce_dice_boundary_kernel(%arg0: i32, %arg1: memref<8x256xf32, #tpu.memory_space<vmem>>, %arg2: memref<8x256xf32, #tpu.memory_space<vmem>>, %arg3: memref<1x128xf32, #tpu.memory_space<vmem>>) attributes {dimension_semantics = [#tpu.dimension_semantics<parallel>], iteration_bounds = array<i64: 1>, scalar_prefetch = 0 : i64, scratch_operands = 0 : i64, tpu.core_type = #tpu.core_type<tc>, window_params = [{transform_indices = @transform_0, window_bounds = array<i64: 8, 256>}, {transform_indices = @transform_1, window_bounds = array<i64: 8, 256>}, {transform_indices = @transform_2, window_bounds = array<i64: 1, 128>}]} {
    %c0 = arith.constant 0 : index
    %c0_0 = arith.constant 0 : index
    %0 = vector.load %arg1[%c0, %c0_0] : memref<8x256xf32, #tpu.memory_space<vmem>>, vector<8x256xf32>
    %c0_1 = arith.constant 0 : index
    %c0_2 = arith.constant 0 : index
    %1 = vector.load %arg2[%c0_1, %c0_2] : memref<8x256xf32, #tpu.memory_space<vmem>>, vector<8x256xf32>
    %2 = math.absf %0 : vector<8x256xf32>
    %cst = arith.constant 0.000000e+00 : f32
    %3 = vector.broadcast %cst : f32 to vector<8x256xf32>
    %4 = arith.subf %3, %2 : vector<8x256xf32>
    %5 = math.exp %4 : vector<8x256xf32>
    %cst_3 = arith.constant 0.000000e+00 : f32
    %6 = vector.broadcast %cst_3 : f32 to vector<8x256xf32>
    %7 = arith.cmpf oge, %0, %6 : vector<8x256xf32>
    %cst_4 = arith.constant 1.000000e+00 : f32
    %8 = vector.broadcast %cst_4 : f32 to vector<8x256xf32>
    %9 = arith.select %7, %8, %5 : vector<8x256xi1>, vector<8x256xf32>
    %cst_5 = arith.constant 1.000000e+00 : f32
    %10 = vector.broadcast %cst_5 : f32 to vector<8x256xf32>
    %11 = arith.addf %10, %5 : vector<8x256xf32>
    %12 = arith.divf %9, %11 : vector<8x256xf32>
    %cst_6 = arith.constant 0.000000e+00 : f32
    %13 = vector.broadcast %cst_6 : f32 to vector<8x256xf32>
    %14 = arith.maximumf %0, %13 : vector<8x256xf32>
    %15 = arith.mulf %0, %1 : vector<8x256xf32>
    %16 = arith.subf %14, %15 : vector<8x256xf32>
    %17 = math.log1p %5 : vector<8x256xf32>
    %18 = arith.addf %16, %17 : vector<8x256xf32>
    %19 = vector.shape_cast %18 : vector<8x256xf32> to vector<1x8x256xf32>
    %cst_7 = arith.constant dense<0.000000e+00> : vector<1xf32>
    %20 = vector.multi_reduction <add>, %19, %cst_7 [1, 2] : vector<1x8x256xf32> to vector<1xf32>
    %21 = vector.shape_cast %20 : vector<1xf32> to vector<1x1x1xf32>
    %22 = vector.extract %21[0, 0, 0] : f32 from vector<1x1x1xf32>
    %23 = arith.mulf %12, %1 : vector<8x256xf32>
    %24 = vector.shape_cast %23 : vector<8x256xf32> to vector<1x8x256xf32>
    %cst_8 = arith.constant dense<0.000000e+00> : vector<1xf32>
    %25 = vector.multi_reduction <add>, %24, %cst_8 [1, 2] : vector<1x8x256xf32> to vector<1xf32>
    %26 = vector.shape_cast %25 : vector<1xf32> to vector<1x1x1xf32>
    %27 = vector.extract %26[0, 0, 0] : f32 from vector<1x1x1xf32>
    %28 = arith.addf %12, %1 : vector<8x256xf32>
    %29 = vector.shape_cast %28 : vector<8x256xf32> to vector<1x8x256xf32>
    %cst_9 = arith.constant dense<0.000000e+00> : vector<1xf32>
    %30 = vector.multi_reduction <add>, %29, %cst_9 [1, 2] : vector<1x8x256xf32> to vector<1xf32>
    %31 = vector.shape_cast %30 : vector<1xf32> to vector<1x1x1xf32>
    %32 = vector.extract %31[0, 0, 0] : f32 from vector<1x1x1xf32>
    %33 = tpu.iota {dimensions = array<i32: 1>} : vector<1x256xi32>
    %c15_i32 = arith.constant 15 : i32
    %34 = vector.broadcast %c15_i32 : i32 to vector<1x256xi32>
    %35 = arith.andi %33, %34 : vector<1x256xi32>
    %c15_i32_10 = arith.constant 15 : i32
    %36 = vector.broadcast %c15_i32_10 : i32 to vector<1x256xi32>
    %37 = arith.cmpi ne, %35, %36 : vector<1x256xi32>
    %cst_11 = arith.constant 5.2083336E-4 : f32
    %cst_12 = arith.constant 0.000000e+00 : f32
    %38 = vector.broadcast %cst_11 : f32 to vector<1x256xf32>
    %39 = vector.broadcast %cst_12 : f32 to vector<1x256xf32>
    %40 = arith.select %37, %38, %39 : vector<1x256xi1>, vector<1x256xf32>
    %c240_i32 = arith.constant 240 : i32
    %41 = vector.broadcast %c240_i32 : i32 to vector<1x256xi32>
    %42 = arith.cmpi slt, %33, %41 : vector<1x256xi32>
    %cst_13 = arith.constant 5.2083336E-4 : f32
    %cst_14 = arith.constant 0.000000e+00 : f32
    %43 = vector.broadcast %cst_13 : f32 to vector<1x256xf32>
    %44 = vector.broadcast %cst_14 : f32 to vector<1x256xf32>
    %45 = arith.select %42, %43, %44 : vector<1x256xi1>, vector<1x256xf32>
    %c255_i32 = arith.constant 255 : i32
    %46 = tpu.dynamic_rotate %12 by %c255_i32 dim 1 : vector<8x256xf32>, i32 -> vector<8x256xf32>
    %c255_i32_15 = arith.constant 255 : i32
    %47 = tpu.dynamic_rotate %1 by %c255_i32_15 dim 1 : vector<8x256xf32>, i32 -> vector<8x256xf32>
    %c240_i32_16 = arith.constant 240 : i32
    %48 = tpu.dynamic_rotate %12 by %c240_i32_16 dim 1 : vector<8x256xf32>, i32 -> vector<8x256xf32>
    %c240_i32_17 = arith.constant 240 : i32
    %49 = tpu.dynamic_rotate %1 by %c240_i32_17 dim 1 : vector<8x256xf32>, i32 -> vector<8x256xf32>
    %50 = arith.subf %12, %46 : vector<8x256xf32>
    %51 = math.absf %50 : vector<8x256xf32>
    %52 = arith.subf %1, %47 : vector<8x256xf32>
    %53 = math.absf %52 : vector<8x256xf32>
    %54 = arith.subf %51, %53 : vector<8x256xf32>
    %55 = math.absf %54 : vector<8x256xf32>
    %56 = vector.broadcast %40 : vector<1x256xf32> to vector<8x256xf32>
    %57 = arith.mulf %55, %56 : vector<8x256xf32>
    %58 = arith.subf %12, %48 : vector<8x256xf32>
    %59 = math.absf %58 : vector<8x256xf32>
    %60 = arith.subf %1, %49 : vector<8x256xf32>
    %61 = math.absf %60 : vector<8x256xf32>
    %62 = arith.subf %59, %61 : vector<8x256xf32>
    %63 = math.absf %62 : vector<8x256xf32>
    %64 = vector.broadcast %45 : vector<1x256xf32> to vector<8x256xf32>
    %65 = arith.mulf %63, %64 : vector<8x256xf32>
    %66 = arith.addf %57, %65 : vector<8x256xf32>
    %67 = vector.shape_cast %66 : vector<8x256xf32> to vector<1x8x256xf32>
    %cst_18 = arith.constant dense<0.000000e+00> : vector<1xf32>
    %68 = vector.multi_reduction <add>, %67, %cst_18 [1, 2] : vector<1x8x256xf32> to vector<1xf32>
    %69 = vector.shape_cast %68 : vector<1xf32> to vector<1x1x1xf32>
    %70 = vector.extract %69[0, 0, 0] : f32 from vector<1x1x1xf32>
    %71 = tpu.iota {dimensions = array<i32: 1>} : vector<1x128xi32>
    %c0_i32 = arith.constant 0 : i32
    %72 = vector.broadcast %c0_i32 : i32 to vector<1x128xi32>
    %73 = arith.cmpi eq, %71, %72 : vector<1x128xi32>
    %cst_19 = arith.constant 0.000000e+00 : f32
    %74 = vector.broadcast %22 : f32 to vector<1x128xf32>
    %75 = vector.broadcast %cst_19 : f32 to vector<1x128xf32>
    %76 = arith.select %73, %74, %75 : vector<1x128xi1>, vector<1x128xf32>
    %c1_i32 = arith.constant 1 : i32
    %77 = vector.broadcast %c1_i32 : i32 to vector<1x128xi32>
    %78 = arith.cmpi eq, %71, %77 : vector<1x128xi32>
    %79 = vector.broadcast %27 : f32 to vector<1x128xf32>
    %80 = arith.select %78, %79, %76 : vector<1x128xi1>, vector<1x128xf32>
    %c2_i32 = arith.constant 2 : i32
    %81 = vector.broadcast %c2_i32 : i32 to vector<1x128xi32>
    %82 = arith.cmpi eq, %71, %81 : vector<1x128xi32>
    %83 = vector.broadcast %32 : f32 to vector<1x128xf32>
    %84 = arith.select %82, %83, %80 : vector<1x128xi1>, vector<1x128xf32>
    %c3_i32 = arith.constant 3 : i32
    %85 = vector.broadcast %c3_i32 : i32 to vector<1x128xi32>
    %86 = arith.cmpi eq, %71, %85 : vector<1x128xi32>
    %87 = vector.broadcast %70 : f32 to vector<1x128xf32>
    %88 = arith.select %86, %87, %84 : vector<1x128xi1>, vector<1x128xf32>
    %c0_20 = arith.constant 0 : index
    %c0_21 = arith.constant 0 : index
    %89 = vector.load %arg3[%c0_20, %c0_21] : memref<1x128xf32, #tpu.memory_space<vmem>>, vector<1x128xf32>
    tpu.vector_store %arg3[%c0_20, %c0_21], %88 {strides = array<i32>} : memref<1x128xf32, #tpu.memory_space<vmem>>, vector<1x128xf32>,
    return
  }
  func.func @transform_0(%arg0: i32) -> (i32, i32) {
    %c0_i32 = arith.constant 0 : i32
    %c0_i32_0 = arith.constant 0 : i32
    return %arg0, %c0_i32 : i32, i32
  }
  func.func @transform_1(%arg0: i32) -> (i32, i32) {
    %c0_i32 = arith.constant 0 : i32
    %c0_i32_0 = arith.constant 0 : i32
    return %arg0, %c0_i32 : i32, i32
  }
  func.func @transform_2(%arg0: i32) -> (i32, i32) {
    %c0_i32 = arith.constant 0 : i32
    %c0_i32_0 = arith.constant 0 : i32
    return %arg0, %c0_i32 : i32, i32
  }
}

</mosaic_0001>

<llo_original>
// kernel: tpu_custom_call.1
$region0: #{tpu_custom_call.1}
  #allocation0 [shape = 'u32[]', space=smem, size = 0x4, offset = 0x4, fixed_abs, tag = 'smem constant byte address 0x4 - core index']
  #allocation1 [shape = 'u32[144,128]{1,0:T(1,128)}', space=vmem, size = 0x12000, scoped, tag = 'internal scratch']
  %s0 = inlined_call_operand.hbm [shape: f32[8,256], index: 0, kind: input, shape index: {}]
  %s1 = inlined_call_operand.hbm [shape: f32[8,256], index: 1, kind: input, shape index: {}]
  %s2 = inlined_call_operand.hbm [shape: f32[1,128], index: 2, kind: output, shape index: {}]
  %s3 = sld [smem:[#allocation0]]
  $region26: #{tpu_custom_call.1} parent=0
    _
  %s5 = ssub.s32 1, %s3
  %s6 = scalar_select 0, %s5, %s3
  $region1: #{tpu_custom_call.1} parent=0
    #allocation2 [shape = 'u8[8192]{0}', space=vmem, size = 0x2000, scoped, tag = 'input window, operand 0, single buffered']
    #allocation3 [shape = 's32[1]{0}', space=sflag, size = 0x4, scoped, tag = 'scoped memory for tpu_custom_call.1']
    #allocation4 [shape = 's32[1]{0}', space=sflag, size = 0x4, scoped, tag = 'scoped memory for tpu_custom_call.1']
    #allocation5 [shape = 'u8[8192]{0}', space=vmem, size = 0x2000, scoped, tag = 'input window, operand 1, single buffered']
    #allocation6 [shape = 's32[1]{0}', space=sflag, size = 0x4, scoped, tag = 'scoped memory for tpu_custom_call.1']
    #allocation7 [shape = 'u8[512]{0}', space=vmem, size = 0x400, scoped, tag = 'output window, operand 0, single buffered']
    %7 = vsyncpa [#allocation3], 0
    %8 = vsyncpa [#allocation6], 0
    %9 = vsyncpa [#allocation4], 0
    // Predicated region
    $region2: #{tpu_custom_call.1} parent=1 // pred_check
      _
    $region3: #{tpu_custom_call.1} parent=1 // pred_check_branch
      %11 = sbr.rel (0) target = $region5
    $region4: #{tpu_custom_call.1} parent=1 // pred_region
      %s13 = ssub.s32 256, 256
      %14 = vsyncadd [#allocation3], %s13
      %s16 = sshll.u32 [#allocation2], 4
      %s17 = int_to_ptr.vmem [resolvable:$true] %s16
      %19 = dma.hbm_to_vmem [thread:$0]  %s0, 256, %s17, [#allocation3]
    $region5: #{tpu_custom_call.1} parent=1 // pred_fallthru
      _
    // Predicated region
    $region6: #{tpu_custom_call.1} parent=1 // pred_check
      _
    $region7: #{tpu_custom_call.1} parent=1 // pred_check_branch
      %21 = sbr.rel (0) target = $region9
    $region8: #{tpu_custom_call.1} parent=1 // pred_region
      %s23 = ssub.s32 256, 256
      %24 = vsyncadd [#allocation6], %s23
      %s26 = sshll.u32 [#allocation5], 4
      %s27 = int_to_ptr.vmem [resolvable:$true] %s26
      %29 = dma.hbm_to_vmem [thread:$0]  %s1, 256, %s27, [#allocation6]
    $region9: #{tpu_custom_call.1} parent=1 // pred_fallthru
      _
    // Predicated region
    $region10: #{tpu_custom_call.1} parent=1 // pred_check
      _
    $region11: #{tpu_custom_call.1} parent=1 // pred_check_branch
      %31 = sbr.rel (0) target = $region13
    $region12: #{tpu_custom_call.1} parent=1 // pred_region
      %32 = dma.done [#allocation3], 256
    $region13: #{tpu_custom_call.1} parent=1 // pred_fallthru
      _
    // Predicated region
    $region14: #{tpu_custom_call.1} parent=1 // pred_check
      _
    $region15: #{tpu_custom_call.1} parent=1 // pred_check_branch
      %34 = sbr.rel (0) target = $region17
    $region16: #{tpu_custom_call.1} parent=1 // pred_region
      %35 = dma.done [#allocation6], 256
    $region17: #{tpu_custom_call.1} parent=1 // pred_fallthru
      _
    %v36 = vld [vmem:[#allocation2] sm:$0xff]
    %v37 = vld [vmem:[#allocation2 + $0x8] sm:$0xff]
    %v38 = vld [vmem:[#allocation5] sm:$0xff]
    %v39 = vld [vmem:[#allocation5 + $0x8] sm:$0xff]
    %v40 = vand.u32 2147483647, %v36
    %v41 = vand.u32 2147483647, %v37
    %v42 = vsub.f32 0.0, %v40
    %v43 = vsub.f32 0.0, %v41
    %v44 = vmul.f32 %v42, 1.442695
    %v45 = vpow.pop %v44
    %v46 = vmul.f32 %v43, 1.442695
    %v47 = vpow.pop %v46
    %vm48 = vcmp.ge.f32.partialorder %v36, 0.0
    %vm49 = vcmp.ge.f32.partialorder %v37, 0.0
    %v50 = vsel %vm48, 1.0, %v45
    %v51 = vsel %vm49, 1.0, %v47
    %v52 = vadd.f32 %v45, 1.0
    %v53 = vadd.f32 %v47, 1.0
    %v54 = vrcp.pop %v52
    %v55 = vmul.f32 %v50, %v54
    %v56 = vrcp.pop %v53
    %v57 = vmul.f32 %v51, %v56
    %v58 = vmax.f32 %v36, 0.0
    %v59 = vmax.f32 %v37, 0.0
    %v60 = vmul.f32 %v36, %v38
    %v61 = vmul.f32 %v37, %v39
    %v62 = vsub.f32 %v58, %v60
    %v63 = vsub.f32 %v59, %v61
    %v64 = vadd.f32 %v45, 1.0
    %v65 = vlog2.pop %v64
    %v66 = vmul.f32 %v65, 0.6931472
    %v67 = vmul.f32 -0.5, %v45
    %v68 = vadd.f32 %v67, 1.0
    %v69 = vmul.f32 %v68, %v45
    %v70 = vand.u32 2147483647, %v45
    %vm71 = vcmp.lt.f32.partialorder %v70, 0.0004427343
    %v72 = vsel %vm71, %v69, %v66
    %v73 = vadd.f32 %v47, 1.0
    %v74 = vlog2.pop %v73
    %v75 = vmul.f32 %v74, 0.6931472
    %v76 = vmul.f32 -0.5, %v47
    %v77 = vadd.f32 %v76, 1.0
    %v78 = vmul.f32 %v77, %v47
    %v79 = vand.u32 2147483647, %v47
    %vm80 = vcmp.lt.f32.partialorder %v79, 0.0004427343
    %v81 = vsel %vm80, %v78, %v75
    %v82 = vadd.f32 %v62, %v72
    %v83 = vadd.f32 %v63, %v81
    %v84 = vadd.f32 %v82, %v83
    %85 = vadd.xlane.f32.xlu0 %v84
    %v86 = vpop.xlane.xlu0 %85
    %v87 = vrot.slane %v86, 4
    %v88 = vadd.f32 %v86, %v87
    %v89 = vrot.slane %v88, 2
    %v90 = vadd.f32 %v88, %v89
    %v91 = vrot.slane %v90, 1
    %v92 = vadd.f32 %v90, %v91
    %s93 = vtos %v92
    %v94 = vmul.f32 %v55, %v38
    %v95 = vmul.f32 %v57, %v39
    %v96 = vadd.f32 %v94, %v95
    %97 = vadd.xlane.f32.xlu0 %v96
    %v98 = vpop.xlane.xlu0 %97
    %v99 = vrot.slane %v98, 4
    %v100 = vadd.f32 %v98, %v99
    %v101 = vrot.slane %v100, 2
    %v102 = vadd.f32 %v100, %v101
    %v103 = vrot.slane %v102, 1
    %v104 = vadd.f32 %v102, %v103
    %s105 = vtos %v104
    %v106 = vadd.f32 %v55, %v38
    %v107 = vadd.f32 %v57, %v39
    %v108 = vadd.f32 %v106, %v107
    %109 = vadd.xlane.f32.xlu0 %v108
    %v110 = vpop.xlane.xlu0 %109
    %v111 = vrot.slane %v110, 4
    %v112 = vadd.f32 %v110, %v111
    %v113 = vrot.slane %v112, 2
    %v114 = vadd.f32 %v112, %v113
    %v115 = vrot.slane %v114, 1
    %v116 = vadd.f32 %v114, %v115
    %s117 = vtos %v116
    %v118 = vlaneseq
    %v119 = vand.u32 %v118, 127
    %v120 = vadd.s32 %v119, 128
    %v121 = vand.u32 %v119, 15
    %v122 = vand.u32 %v120, 15
    %vm123 = vcmp.ne.s32.totalorder %v121, 15
    %vm124 = vcmp.ne.s32.totalorder %v122, 15
    %v125 = vsel %vm123, 0.00052083336, 0.0
    %v126 = vsel %vm124, 0.00052083336, 0.0
    %vm127 = vcmp.lt.s32.totalorder %v119, 240
    %vm128 = vcmp.lt.s32.totalorder %v120, 240
    %v129 = vsel %vm127, 0.00052083336, 0.0
    %v130 = vsel %vm128, 0.00052083336, 0.0
    %131 = vrot.lane.b32.xlu0 %v55, 127
    %v132 = vpop.permute.xlu0 %131
    %133 = vrot.lane.b32.xlu0 %v57, 127
    %v134 = vpop.permute.xlu0 %133
    %vm135 = vcmp.lt.s32.totalorder %v119, 127
    %v136 = vsel %vm135, %v132, %v134
    %v137 = vsel %vm135, %v134, %v132
    %138 = vrot.lane.b32.xlu0 %v38, 127
    %v139 = vpop.permute.xlu0 %138
    %140 = vrot.lane.b32.xlu0 %v39, 127
    %v141 = vpop.permute.xlu0 %140
    %v142 = vsel %vm135, %v139, %v141
    %v143 = vsel %vm135, %v141, %v139
    %144 = vrot.lane.b32.xlu0 %v55, 112
    %v145 = vpop.permute.xlu0 %144
    %146 = vrot.lane.b32.xlu0 %v57, 112
    %v147 = vpop.permute.xlu0 %146
    %vm148 = vcmp.lt.s32.totalorder %v119, 112
    %v149 = vsel %vm148, %v145, %v147
    %v150 = vsel %vm148, %v147, %v145
    %151 = vrot.lane.b32.xlu0 %v38, 112
    %v152 = vpop.permute.xlu0 %151
    %153 = vrot.lane.b32.xlu0 %v39, 112
    %v154 = vpop.permute.xlu0 %153
    %v155 = vsel %vm148, %v152, %v154
    %v156 = vsel %vm148, %v154, %v152
    %v157 = vsub.f32 %v55, %v136
    %v158 = vsub.f32 %v57, %v137
    %v159 = vand.u32 2147483647, %v157
    %v160 = vand.u32 2147483647, %v158
    %v161 = vsub.f32 %v38, %v142
    %v162 = vsub.f32 %v39, %v143
    %v163 = vand.u32 2147483647, %v161
    %v164 = vand.u32 2147483647, %v162
    %v165 = vsub.f32 %v159, %v163
    %v166 = vsub.f32 %v160, %v164
    %v167 = vand.u32 2147483647, %v165
    %v168 = vand.u32 2147483647, %v166
    %v169 = vmul.f32 %v167, %v125
    %v170 = vmul.f32 %v168, %v126
    %v171 = vsub.f32 %v55, %v149
    %v172 = vsub.f32 %v57, %v150
    %v173 = vand.u32 2147483647, %v171
    %v174 = vand.u32 2147483647, %v172
    %v175 = vsub.f32 %v38, %v155
    %v176 = vsub.f32 %v39, %v156
    %v177 = vand.u32 2147483647, %v175
    %v178 = vand.u32 2147483647, %v176
    %v179 = vsub.f32 %v173, %v177
    %v180 = vsub.f32 %v174, %v178
    %v181 = vand.u32 2147483647, %v179
    %v182 = vand.u32 2147483647, %v180
    %v183 = vmul.f32 %v181, %v129
    %v184 = vmul.f32 %v182, %v130
    %v185 = vadd.f32 %v169, %v183
    %v186 = vadd.f32 %v170, %v184
    %v187 = vadd.f32 %v185, %v186
    %188 = vadd.xlane.f32.xlu0 %v187
    %v189 = vpop.xlane.xlu0 %188
    %v190 = vrot.slane %v189, 4
    %v191 = vadd.f32 %v189, %v190
    %v192 = vrot.slane %v191, 2
    %v193 = vadd.f32 %v191, %v192
    %v194 = vrot.slane %v193, 1
    %v195 = vadd.f32 %v193, %v194
    %s196 = vtos %v195
    %vm197 = vcmp.eq.s32.totalorder %v119, 0
    %v198 = vstv %s93
    %v199 = vsel %vm197, %v198, 0.0
    %vm200 = vcmp.eq.s32.totalorder %v119, 1
    %v201 = vstv %s105
    %v202 = vsel %vm200, %v201, %v199
    %vm203 = vcmp.eq.s32.totalorder %v119, 2
    %v204 = vstv %s117
    %v205 = vsel %vm203, %v204, %v202
    %vm206 = vcmp.eq.s32.totalorder %v119, 3
    %v207 = vstv %s196
    %v208 = vsel %vm206, %v207, %v205
    %209 = vst [vmem:[#allocation7] sm:$0x1] %v208
    // Predicated region
    $region18: #{tpu_custom_call.1} parent=1 // pred_check
      _
    $region19: #{tpu_custom_call.1} parent=1 // pred_check_branch
      %211 = sbr.rel (0) target = $region21
    $region20: #{tpu_custom_call.1} parent=1 // pred_region
      %s213 = ssub.s32 16, 16
      %214 = vsyncadd [#allocation4], %s213
      %s216 = sshll.u32 [#allocation7], 4
      %s217 = int_to_ptr.vmem [resolvable:$true] %s216
      %219 = dma.vmem_to_hbm [thread:$0]  %s217, 16, %s2, [#allocation4]
    $region21: #{tpu_custom_call.1} parent=1 // pred_fallthru
      _
    // Predicated region
    $region22: #{tpu_custom_call.1} parent=1 // pred_check
      _
    $region23: #{tpu_custom_call.1} parent=1 // pred_check_branch
      %221 = sbr.rel (0) target = $region25
    $region24: #{tpu_custom_call.1} parent=1 // pred_region
      %222 = dma.done [#allocation4], 16
    $region25: #{tpu_custom_call.1} parent=1 // pred_fallthru
      _
    %223 = vsyncpa [#allocation3], 1
    %224 = vsyncpa [#allocation6], 1
    %225 = vsyncpa [#allocation4], 1

</llo_original>
